<compile_context>
chip_gen: v7x
topology: tpu7x:2x2x1
jax: 0.10.0
libtpu: 0.0.40
codegen_flags: <defaults>
</compile_context>

<pallas_src>
import functools

import jax
import jax.numpy as jnp
from jax import lax
from jax.experimental import pallas as pl
from jax.experimental.pallas import tpu as pltpu

_MAX_TILE_B_DEFAULT = 2048  # lane-dense columns per grid step (multiple of 128)


def _round_up(x, m):
    return (x + m - 1) // m * m


def _focal_loss_kernel(preds_ref, labels_ref, out_ref, *, alpha, gamma, true_b):
    # preds_ref:  (C, TB)    native dtype, classes on sublanes, batch on lanes
    # labels_ref: (1, TB)    int32
    # out_ref:    (1, 1, 128) f32 — per-tile partial sum in lane 0
    preds = preds_ref[...].astype(jnp.float32)          # (C, TB)
    labels = labels_ref[...]                             # (1, TB)
    C, TB = preds.shape

    # Numerically-stable log-softmax over the class (sublane) axis.
    m = jnp.max(preds, axis=0, keepdims=True)            # (1, TB) sublane reduce over C
    shifted = preds - m                                   # (C, TB)
    lse = jnp.log(jnp.sum(jnp.exp(shifted), axis=0, keepdims=True))  # (1, TB)
    logp = shifted - lse                                  # (C, TB)

    if C <= 8:
        # Per-lane select chains — pure VPU, no cross-lane work.
        logp_sel = logp[0:1, :]
        for c in range(1, C):
            logp_sel = jnp.where(labels == c, logp[c:c + 1, :], logp_sel)
        alpha_sel = jnp.full((1, TB), jnp.float32(alpha[0]), jnp.float32)
        for c in range(1, C):
            alpha_sel = jnp.where(labels == c, jnp.float32(alpha[c]), alpha_sel)
    else:
        # Larger class counts: one-hot mask + sublane (class-axis) reductions.
        onehot = lax.broadcasted_iota(jnp.int32, (C, TB), 0) == labels
        zeros = jnp.zeros((C, TB), jnp.float32)
        logp_sel = jnp.sum(jnp.where(onehot, logp, zeros), axis=0, keepdims=True)
        alpha_const = jnp.asarray(alpha, jnp.float32).reshape(C, 1)
        alpha_sel = jnp.sum(
            jnp.where(onehot, jnp.broadcast_to(alpha_const, (C, TB)), zeros),
            axis=0, keepdims=True)

    p_sel = jnp.exp(logp_sel)                             # softmax prob of label class
    one_minus_p = 1.0 - p_sel

    # (1 - p)^gamma: integer gamma -> VPU multiply chain, else generic pow (EUP).
    if float(gamma) == int(gamma) and int(gamma) >= 0:
        g = int(gamma)
        pw = jnp.ones_like(one_minus_p)
        base = one_minus_p
        while g > 0:
            if g & 1:
                pw = pw * base
            g >>= 1
            if g:
                base = base * base
    else:
        pw = jnp.power(one_minus_p, jnp.float32(gamma))

    loss = -alpha_sel * pw * logp_sel                     # (1, TB)

    # Mask padded batch columns (global batch index >= true_b).
    col = lax.broadcasted_iota(jnp.int32, (1, TB), 1) + pl.program_id(0) * TB
    loss = jnp.where(col < true_b, loss, jnp.float32(0.0))

    # One small cross-lane reduce per tile -> scalar partial; write lane-aligned.
    partial = jnp.sum(loss)
    lane = lax.broadcasted_iota(jnp.int32, (1, 1, 128), 2)
    out_ref[...] = jnp.where(lane == 0, partial, jnp.float32(0.0))


def make_focal_loss(alpha=0.25, gamma=2, num_classes=2, size_average=True,
                    max_tile_b=_MAX_TILE_B_DEFAULT):
    """Builds the alpha vector exactly like the PyTorch module; returns a callable."""
    if isinstance(alpha, (list, tuple)):
        assert len(alpha) == num_classes
        alpha_t = tuple(float(a) for a in alpha)
    else:
        assert alpha < 1
        alpha_t = (float(alpha),) + (float(1.0 - alpha),) * (num_classes - 1)

    max_tile_b = max(128, _round_up(int(max_tile_b), 128))

    @jax.jit
    def focal_loss_fn(preds, labels):
        # preds: [B, C] float (any float dtype), labels: [B] int
        B, C = preds.shape
        assert C == num_classes

        # Lane-dense layout: classes -> sublanes, batch -> lanes (layout plumbing only).
        preds_t = preds.T                                   # (C, B), native dtype
        labels2d = labels.astype(jnp.int32).reshape(1, B)   # (1, B)

        tile_b = min(_round_up(B, 128), max_tile_b)
        b_pad = _round_up(B, tile_b)
        if b_pad != B:
            preds_t = jnp.pad(preds_t, ((0, 0), (0, b_pad - B)))
            labels2d = jnp.pad(labels2d, ((0, 0), (0, b_pad - B)))
        num_tiles = b_pad // tile_b

        kernel = functools.partial(
            _focal_loss_kernel, alpha=alpha_t, gamma=gamma, true_b=B)

        bytes_accessed = (preds.size * preds.dtype.itemsize  # logits
                          + 4 * B                            # labels (int32)
                          + 512 * num_tiles)                 # partial sums
        partials = pl.pallas_call(
            kernel,
            out_shape=jax.ShapeDtypeStruct((num_tiles, 1, 128), jnp.float32),
            grid=(num_tiles,),
            in_specs=[
                pl.BlockSpec((C, tile_b), lambda i: (0, i)),
                pl.BlockSpec((1, tile_b), lambda i: (0, i)),
            ],
            out_specs=pl.BlockSpec((1, 1, 128), lambda i: (i, 0, 0)),
            compiler_params=pltpu.CompilerParams(
                dimension_semantics=("parallel",)),
            cost_estimate=pl.CostEstimate(
                flops=12 * B * C,
                transcendentals=3 * B,
                bytes_accessed=int(bytes_accessed)),
        )(preds_t, labels2d)

        total = jnp.sum(partials)
        if size_average:
            total = total / jnp.float32(B)
        return total

    return focal_loss_fn


def _reference(preds, labels, alpha_vec, gamma, size_average):
    logp = jax.nn.log_softmax(preds.astype(jnp.float32), axis=1)
    p = jnp.exp(logp)
    idx = labels.astype(jnp.int32)
    logp_sel = jnp.take_along_axis(logp, idx[:, None], axis=1)[:, 0]
    p_sel = jnp.take_along_axis(p, idx[:, None], axis=1)[:, 0]
    a_sel = jnp.asarray(alpha_vec, jnp.float32)[idx]
    loss = -a_sel * (1.0 - p_sel) ** gamma * logp_sel
    return loss.mean() if size_average else loss.sum()


if __name__ == "__main__":
    key = jax.random.PRNGKey(0)

    # Case 1: default module config (alpha=0.25, gamma=2, C=2), mean reduction.
    k1, k2 = jax.random.split(key)
    B, C = 8, 2
    preds = jax.random.normal(k1, (B, C), dtype=jnp.float32)
    labels = jax.random.randint(k2, (B,), 0, C, dtype=jnp.int32)
    focal = make_focal_loss(alpha=0.25, gamma=2, num_classes=C, size_average=True)
    out = jax.block_until_ready(focal(preds, labels))
    ref = _reference(preds, labels, [0.25] + [0.75] * (C - 1), 2, True)
    assert jnp.allclose(out, ref, atol=1e-5, rtol=1e-5), (out, ref)

    # Case 2: list alpha, C=3, sum reduction, B not a multiple of the tile size.
    # Small max_tile_b forces multiple grid steps + remainder masking.
    k3, k4 = jax.random.split(k1)
    B2, C2 = 300, 3
    alpha_list = [0.2, 0.3, 0.5]
    preds2 = jax.random.normal(k3, (B2, C2), dtype=jnp.float32)
    labels2 = jax.random.randint(k4, (B2,), 0, C2, dtype=jnp.int32)
    focal2 = make_focal_loss(alpha=alpha_list, gamma=2, num_classes=C2,
                             size_average=False, max_tile_b=128)
    out2 = jax.block_until_ready(focal2(preds2, labels2))
    ref2 = _reference(preds2, labels2, alpha_list, 2, False)
    assert jnp.allclose(out2, ref2, atol=1e-4, rtol=1e-4), (out2, ref2)

    print("KERNEL_OK")
</pallas_src>

<mosaic_0001>
module attributes {stable_mosaic.version = 11 : i64} {
  func.func @_focal_loss_kernel(%arg0: i32, %arg1: memref<2x128xf32, #tpu.memory_space<vmem>>, %arg2: memref<1x128xi32, #tpu.memory_space<vmem>>, %arg3: memref<1x1x128xf32, #tpu.memory_space<vmem>>) attributes {dimension_semantics = [#tpu.dimension_semantics<parallel>], iteration_bounds = array<i64: 1>, scalar_prefetch = 0 : i64, scratch_operands = 0 : i64, tpu.core_type = #tpu.core_type<tc>, window_params = [{transform_indices = @transform_0, window_bounds = array<i64: 2, 128>}, {transform_indices = @transform_1, window_bounds = array<i64: 1, 128>}, {transform_indices = @transform_2, window_bounds = array<i64: 1, 1, 128>}]} {
    %c0 = arith.constant 0 : index
    %c0_0 = arith.constant 0 : index
    %0 = vector.load %arg1[%c0, %c0_0] : memref<2x128xf32, #tpu.memory_space<vmem>>, vector<2x128xf32>
    %c0_1 = arith.constant 0 : index
    %c0_2 = arith.constant 0 : index
    %1 = vector.load %arg2[%c0_1, %c0_2] : memref<1x128xi32, #tpu.memory_space<vmem>>, vector<1x128xi32>
    %cst = arith.constant dense<0xFF800000> : vector<128xf32>
    %2 = vector.multi_reduction <maximumf>, %0, %cst [0] : vector<2x128xf32> to vector<128xf32>
    %3 = vector.shape_cast %2 : vector<128xf32> to vector<1x128xf32>
    %4 = vector.broadcast %3 : vector<1x128xf32> to vector<2x128xf32>
    %5 = arith.subf %0, %4 : vector<2x128xf32>
    %6 = math.exp %5 : vector<2x128xf32>
    %cst_3 = arith.constant dense<0.000000e+00> : vector<128xf32>
    %7 = vector.multi_reduction <add>, %6, %cst_3 [0] : vector<2x128xf32> to vector<128xf32>
    %8 = vector.shape_cast %7 : vector<128xf32> to vector<1x128xf32>
    %9 = math.log %8 : vector<1x128xf32>
    %10 = vector.broadcast %9 : vector<1x128xf32> to vector<2x128xf32>
    %11 = arith.subf %5, %10 : vector<2x128xf32>
    %12 = vector.extract_strided_slice %11 {offsets = [0, 0], sizes = [1, 128], strides = [1, 1]} : vector<2x128xf32> to vector<1x128xf32>
    %c1_i32 = arith.constant 1 : i32
    %13 = vector.broadcast %c1_i32 : i32 to vector<1x128xi32>
    %14 = arith.cmpi eq, %1, %13 : vector<1x128xi32>
    %15 = vector.extract_strided_slice %11 {offsets = [1, 0], sizes = [1, 128], strides = [1, 1]} : vector<2x128xf32> to vector<1x128xf32>
    %16 = arith.select %14, %15, %12 : vector<1x128xi1>, vector<1x128xf32>
    %cst_4 = arith.constant 2.500000e-01 : f32
    %17 = vector.broadcast %cst_4 : f32 to vector<1x128xf32>
    %c1_i32_5 = arith.constant 1 : i32
    %18 = vector.broadcast %c1_i32_5 : i32 to vector<1x128xi32>
    %19 = arith.cmpi eq, %1, %18 : vector<1x128xi32>
    %cst_6 = arith.constant 7.500000e-01 : f32
    %20 = vector.broadcast %cst_6 : f32 to vector<1x128xf32>
    %21 = arith.select %19, %20, %17 : vector<1x128xi1>, vector<1x128xf32>
    %22 = math.exp %16 : vector<1x128xf32>
    %cst_7 = arith.constant 1.000000e+00 : f32
    %23 = vector.broadcast %cst_7 : f32 to vector<1x128xf32>
    %24 = arith.subf %23, %22 : vector<1x128xf32>
    %cst_8 = arith.constant 1.000000e+00 : f32
    %25 = vector.broadcast %cst_8 : f32 to vector<1x128xf32>
    %26 = arith.mulf %24, %24 : vector<1x128xf32>
    %27 = arith.mulf %25, %26 : vector<1x128xf32>
    %cst_9 = arith.constant 0.000000e+00 : f32
    %28 = vector.broadcast %cst_9 : f32 to vector<1x128xf32>
    %29 = arith.subf %28, %21 : vector<1x128xf32>
    %30 = arith.mulf %29, %27 : vector<1x128xf32>
    %31 = arith.mulf %30, %16 : vector<1x128xf32>
    %32 = tpu.iota {dimensions = array<i32: 1>} : vector<1x128xi32>
    %c128_i32 = arith.constant 128 : i32
    %33 = arith.muli %arg0, %c128_i32 : i32
    %34 = vector.broadcast %33 : i32 to vector<1x128xi32>
    %35 = arith.addi %32, %34 : vector<1x128xi32>
    %c8_i32 = arith.constant 8 : i32
    %36 = vector.broadcast %c8_i32 : i32 to vector<1x128xi32>
    %37 = arith.cmpi slt, %35, %36 : vector<1x128xi32>
    %cst_10 = arith.constant 0.000000e+00 : f32
    %38 = vector.broadcast %cst_10 : f32 to vector<1x128xf32>
    %39 = arith.select %37, %31, %38 : vector<1x128xi1>, vector<1x128xf32>
    %40 = vector.shape_cast %39 : vector<1x128xf32> to vector<1x1x128xf32>
    %cst_11 = arith.constant dense<0.000000e+00> : vector<1xf32>
    %41 = vector.multi_reduction <add>, %40, %cst_11 [1, 2] : vector<1x1x128xf32> to vector<1xf32>
    %42 = vector.shape_cast %41 : vector<1xf32> to vector<1x1x1xf32>
    %43 = vector.extract %42[0, 0, 0] : f32 from vector<1x1x1xf32>
    %44 = tpu.iota {dimensions = array<i32: 2>} : vector<1x1x128xi32>
    %c0_i32 = arith.constant 0 : i32
    %45 = vector.broadcast %c0_i32 : i32 to vector<1x1x128xi32>
    %46 = arith.cmpi eq, %44, %45 : vector<1x1x128xi32>
    %cst_12 = arith.constant 0.000000e+00 : f32
    %47 = vector.broadcast %43 : f32 to vector<1x1x128xf32>
    %48 = vector.broadcast %cst_12 : f32 to vector<1x1x128xf32>
    %49 = arith.select %46, %47, %48 : vector<1x1x128xi1>, vector<1x1x128xf32>
    %c0_13 = arith.constant 0 : index
    %c0_14 = arith.constant 0 : index
    %c0_15 = arith.constant 0 : index
    %50 = vector.load %arg3[%c0_13, %c0_14, %c0_15] : memref<1x1x128xf32, #tpu.memory_space<vmem>>, vector<1x1x128xf32>
    tpu.vector_store %arg3[%c0_13, %c0_14, %c0_15], %49 {strides = array<i32>} : memref<1x1x128xf32, #tpu.memory_space<vmem>>, vector<1x1x128xf32>,
    return
  }
  func.func @transform_0(%arg0: i32) -> (i32, i32) {
    %c0_i32 = arith.constant 0 : i32
    %c0_i32_0 = arith.constant 0 : i32
    return %c0_i32, %arg0 : i32, i32
  }
  func.func @transform_1(%arg0: i32) -> (i32, i32) {
    %c0_i32 = arith.constant 0 : i32
    %c0_i32_0 = arith.constant 0 : i32
    return %c0_i32, %arg0 : i32, i32
  }
  func.func @transform_2(%arg0: i32) -> (i32, i32, i32) {
    %c0_i32 = arith.constant 0 : i32
    %c0_i32_0 = arith.constant 0 : i32
    %c0_i32_1 = arith.constant 0 : i32
    return %arg0, %c0_i32, %c0_i32_0 : i32, i32, i32
  }
}

</mosaic_0001>

<llo_original>
// kernel: focal_loss_fn.1
$region0: #{focal_loss_fn.1}
  #allocation0 [shape = 'u32[]', space=smem, size = 0x4, offset = 0x4, fixed_abs, tag = 'smem constant byte address 0x4 - core index']
  #allocation1 [shape = 'u32[144,128]{1,0:T(1,128)}', space=vmem, size = 0x12000, scoped, tag = 'internal scratch']
  %s0 = inlined_call_operand.vmem [shape: f32[2,128], index: 0, kind: input, shape index: {}]
  %s1 = inlined_call_operand.vmem [shape: s32[1,128], index: 1, kind: input, shape index: {}]
  %s2 = inlined_call_operand.vmem [shape: f32[1,1,128], index: 2, kind: output, shape index: {}]
  %s3 = sld [smem:[#allocation0]]
  $region18: #{focal_loss_fn.1} parent=0
    _
  %s5 = ssub.s32 1, %s3
  %s6 = scalar_select 0, %s5, %s3
  // Predicated region
  $region2: #{focal_loss_fn.1} parent=0 // pred_check
    _
  $region3: #{focal_loss_fn.1} parent=0 // pred_check_branch
    %8 = sbr.rel (0) target = $region5
  $region4: #{focal_loss_fn.1} parent=0 // pred_region
    _
  $region5: #{focal_loss_fn.1} parent=0 // pred_fallthru
    _
  // Predicated region
  $region6: #{focal_loss_fn.1} parent=0 // pred_check
    _
  $region7: #{focal_loss_fn.1} parent=0 // pred_check_branch
    %10 = sbr.rel (0) target = $region9
  $region8: #{focal_loss_fn.1} parent=0 // pred_region
    _
  $region9: #{focal_loss_fn.1} parent=0 // pred_fallthru
    _
  %v11 = vld [vmem:[%s0] sm:$0x3]
  %v12 = vld [vmem:[%s1] sm:$0x1]
  %vm13 = vcmask 1041408
  %v14 = vsel %vm13, %v11, -inf
  %v15 = vrot.slane %v14, 4
  %v16 = vmax.f32 %v14, %v15
  %v17 = vrot.slane %v16, 2
  %v18 = vmax.f32 %v16, %v17
  %v19 = vrot.slane %v18, 1
  %v20 = vmax.f32 %v18, %v19
  %v21 = vsub.f32 %v11, %v20
  %v22 = vmul.f32 %v21, 1.442695
  %v23 = vpow.pop %v22
  %v24 = vsel %vm13, %v23, 0.0
  %v25 = vrot.slane %v24, 4
  %v26 = vadd.f32 %v24, %v25
  %v27 = vrot.slane %v26, 2
  %v28 = vadd.f32 %v26, %v27
  %v29 = vrot.slane %v28, 1
  %v30 = vadd.f32 %v28, %v29
  %v31 = vlog2.pop %v30
  %v32 = vmul.f32 %v31, 0.6931472
  %v33 = vsub.f32 %v21, %v32
  %vm34 = vcmp.eq.s32.totalorder %v12, 1
  %v37 = vunpack.c.l.s4 1966171168
  %v38 = vunpack.c.0.s8 %v37
  %v39 = vlaneseq
  %v40 = vshrl.u32 %v39, 7
  %v41 = vsub.s32 %v38, %v40
  %v42 = vrot.slane %v33, %v41
  %v43 = vcombine.high %v42, %v42
  %v45 = vunpack.c.l.s4 1966171168
  %v46 = vunpack.c.0.s8 %v45
  %v47 = vlaneseq
  %v48 = vshrl.u32 %v47, 7
  %v49 = vsub.s32 %v46, %v48
  %v50 = vrot.slane %v43, %v49
  %v52 = vsel %vm34, %v50, %v33
  %v53 = vsel %vm34, 0.75, 0.25
  %v54 = vmul.f32 %v52, 1.442695
  %v55 = vpow.pop %v54
  %v56 = vsub.f32 1.0, %v55
  %v57 = vmul.f32 %v56, %v56
  %v58 = vsub.f32 0.0, %v53
  %v59 = vmul.f32 %v58, %v57
  %v60 = vmul.f32 %v59, %v52
  %v61 = vlaneseq
  %v62 = vand.u32 %v61, 127
  %s63 = smul.u32 0, 128
  %v64 = vstv %s63
  %v65 = vadd.s32 %v62, %v64
  %vm66 = vcmp.lt.s32.totalorder %v65, 8
  %v67 = vsel %vm66, %v60, 0.0
  %vm68 = vcmask 1040384
  %v69 = vsel %vm68, %v67, 0.0
  %70 = vadd.xlane.f32.xlu0 %v69
  %v71 = vpop.xlane.xlu0 %70
  %v72 = vrot.slane %v71, 4
  %v73 = vadd.f32 %v71, %v72
  %v74 = vrot.slane %v73, 2
  %v75 = vadd.f32 %v73, %v74
  %v76 = vrot.slane %v75, 1
  %v77 = vadd.f32 %v75, %v76
  %s78 = vtos %v77
  %vm79 = vcmp.eq.s32.totalorder %v62, 0
  %v80 = vstv %s78
  %v81 = vsel %vm79, %v80, 0.0
  %82 = vst [vmem:[%s2] sm:$0x1] %v81
  // Predicated region
  $region10: #{focal_loss_fn.1} parent=0 // pred_check
    _
  $region11: #{focal_loss_fn.1} parent=0 // pred_check_branch
    %84 = sbr.rel (0) target = $region13
  $region12: #{focal_loss_fn.1} parent=0 // pred_region
    _
  $region13: #{focal_loss_fn.1} parent=0 // pred_fallthru
    _
  // Predicated region
  $region14: #{focal_loss_fn.1} parent=0 // pred_check
    _
  $region15: #{focal_loss_fn.1} parent=0 // pred_check_branch
    %86 = sbr.rel (0) target = $region17
  $region16: #{focal_loss_fn.1} parent=0 // pred_region
    _
  $region17: #{focal_loss_fn.1} parent=0 // pred_fallthru
    _

</llo_original>
